<compile_context>
chip_gen: v5e
topology: v5e:2x2
jax: 0.10.0
libtpu: 0.0.40
codegen_flags: <defaults>
</compile_context>

<pallas_src>
import functools

import jax
import jax.numpy as jnp
from jax.experimental import pallas as pl
from jax.experimental.pallas import tpu as pltpu

_LANE = 128
_SUBLANE = 8
_MIB = 1024 * 1024


def _round_up(x, m):
    return ((x + m - 1) // m) * m


def _ff_kernel(x_ref, w1_ref, b1_ref, w2_ref, b2_ref, o_ref, acc_ref):
    # x_ref:  (tile_m, H)
    # w1_ref: (H, tile_f)   b1_ref: (1, tile_f)
    # w2_ref: (tile_f, H)   b2_ref: (1, H)
    # o_ref:  (tile_m, H)   acc_ref: (tile_m, H) f32 scratch
    j = pl.program_id(1)

    @pl.when(j == 0)
    def _init():
        acc_ref[...] = jnp.zeros_like(acc_ref)

    # Linear(H -> F_tile) + bias, ReLU  (MXU matmul, f32 accumulation).
    h = jnp.dot(x_ref[...], w1_ref[...], preferred_element_type=jnp.float32)
    h = jnp.maximum(h + b1_ref[...], 0.0)
    # Dropout (eval) == identity.
    # Partial sum of Linear(F_tile -> H) over the filter tiles.
    acc_ref[...] += jnp.dot(h.astype(w2_ref.dtype), w2_ref[...],
                            preferred_element_type=jnp.float32)

    @pl.when(j == pl.num_programs(1) - 1)
    def _finalize():
        y = jnp.maximum(acc_ref[...] + b2_ref[...], 0.0)
        # Dropout (eval) == identity.
        o_ref[...] = y.astype(o_ref.dtype)


def _tpu_vmem_and_cores():
    """(VMEM capacity bytes, # TensorCores), with conservative fallbacks."""
    vmem_cap = 64 * _MIB   # conservative: v7x per-core VMEM
    cores = 1              # conservative: v5e/v6e have one TensorCore per chip
    try:
        info = pltpu.get_tpu_info()
    except Exception:
        return vmem_cap, cores
    try:
        cap = int(getattr(info, "vmem_capacity_bytes", 0) or 0)
        if cap > 0:
            vmem_cap = cap
    except Exception:
        pass
    for name in ("num_tensorcores", "tensorcore_count", "num_cores", "core_count"):
        try:
            v = int(getattr(info, name, 0) or 0)
        except Exception:
            v = 0
        if v > 0:
            cores = v
            break
    return vmem_cap, cores


def _plan(M, H, F, itemsize, vmem_cap, cores):
    """Pick (tile_m, grid_m, tile_f, grid_f, Fp, vmem_limit)."""
    budget = int(0.60 * vmem_cap)

    # Weight blocks, counted as double-buffered by the default pipeline
    # (conservative; the index_map is constant in the resident case).
    def w_bytes(tf):
        return 2 * 2 * H * tf * itemsize

    if w_bytes(F) <= budget // 2:
        tile_f, Fp = F, F                     # fully resident weights, 1 f-step
    else:
        tile_f = _LANE                        # stream W1/W2 over the F axis
        for cand in (4096, 2048, 1024, 512, 256, 128):
            if cand < F and w_bytes(cand) <= budget // 2:
                tile_f = cand
                break
        Fp = _round_up(F, tile_f)             # zero padding keeps math exact
    grid_f = Fp // tile_f

    # Everything that scales with the row tile (incl. live temporaries).
    def act_bytes(tm):
        return (2 * tm * H * itemsize         # x tile, double-buffered
                + 2 * tm * H * itemsize       # out tile, double-buffered
                + tm * H * 4                  # f32 accumulator scratch
                + tm * tile_f * 4             # f32 intermediate h
                + tm * tile_f * itemsize)     # cast copy of h for 2nd GEMM

    fixed = w_bytes(tile_f) + 4 * (tile_f + H) * itemsize   # weights + biases
    tile_m = _SUBLANE
    for cand in (1024, 512, 256, 128, 64, 32, 16, 8):       # MXU-friendly first
        if fixed + act_bytes(cand) <= budget:
            tile_m = cand
            break
    # Don't tile far beyond the (sublane-rounded) problem size.
    tile_m = min(tile_m, max(_round_up(M, _SUBLANE), _SUBLANE))
    # Megacore: only split small-M work if the chip really has >1 TensorCore.
    if cores > 1 and pl.cdiv(M, tile_m) == 1 and tile_m >= 2 * _SUBLANE:
        tile_m //= 2
    grid_m = pl.cdiv(M, tile_m)

    vmem_needed = fixed + act_bytes(tile_m)
    vmem_limit = int(min(max(int(vmem_needed * 1.3) + 2 * _MIB, 32 * _MIB),
                         int(0.85 * vmem_cap)))
    return tile_m, grid_m, tile_f, grid_f, Fp, vmem_limit


@jax.jit
def feedforward(x, w1, b1, w2, b2):
    """Eval-mode SATRN Feedforward: relu(relu(x @ W1 + b1) @ W2 + b2).

    x: (B, S, H).  w1: (H, F), b1: (F,).  w2: (F, H), b2: (H,).
    (PyTorch nn.Linear stores weight as (out, in); pass the transpose.)
    """
    B, S, H = x.shape
    F = w1.shape[1]
    M = B * S
    dtype = x.dtype
    itemsize = jnp.dtype(dtype).itemsize

    vmem_cap, cores = _tpu_vmem_and_cores()
    tile_m, grid_m, tile_f, grid_f, Fp, vmem_limit = _plan(
        M, H, F, itemsize, vmem_cap, cores)

    x2d = x.reshape(M, H)                     # no M / H padding round trip
    b1r = b1.reshape(1, F)
    b2r = b2.reshape(1, H)
    if Fp != F:
        # Only in the weight-streaming case; zero padding is mathematically
        # exact (relu(x@0 + 0) = 0 and zero W2 rows contribute nothing).
        w1c = jnp.pad(w1, ((0, 0), (0, Fp - F)))
        b1c = jnp.pad(b1r, ((0, 0), (0, Fp - F)))
        w2c = jnp.pad(w2, ((0, Fp - F), (0, 0)))
    else:
        w1c, b1c, w2c = w1, b1r, w2

    # Advisory cost estimate for XLA's scheduler (real, unpadded dims).
    flops = 4 * M * H * F                                   # two GEMMs
    bytes_accessed = (2 * M * H * itemsize                  # x + out
                      + 2 * H * F * itemsize                # W1 + W2
                      + (H + F) * itemsize)                 # biases
    cost = pl.CostEstimate(flops=flops, transcendentals=0,
                           bytes_accessed=bytes_accessed)

    out2d = pl.pallas_call(
        _ff_kernel,
        out_shape=jax.ShapeDtypeStruct((M, H), dtype),
        grid_spec=pltpu.PrefetchScalarGridSpec(
            num_scalar_prefetch=0,
            grid=(grid_m, grid_f),
            in_specs=[
                pl.BlockSpec((tile_m, H), lambda i, j: (i, 0)),    # x rows
                pl.BlockSpec((H, tile_f), lambda i, j: (0, j)),    # W1 tile
                pl.BlockSpec((1, tile_f), lambda i, j: (0, j)),    # b1 tile
                pl.BlockSpec((tile_f, H), lambda i, j: (j, 0)),    # W2 tile
                pl.BlockSpec((1, H), lambda i, j: (0, 0)),         # b2
            ],
            out_specs=pl.BlockSpec((tile_m, H), lambda i, j: (i, 0)),
            scratch_shapes=[pltpu.VMEM((tile_m, H), jnp.float32)],
        ),
        compiler_params=pltpu.CompilerParams(
            dimension_semantics=("parallel", "arbitrary"),
            vmem_limit_bytes=vmem_limit),
        cost_estimate=cost,
    )(x2d, w1c, b1c, w2c, b2r)

    return out2d.reshape(B, S, H)


def _reference(x, w1, b1, w2, b2):
    h = jnp.maximum(jnp.einsum("bsh,hf->bsf", x, w1) + b1, 0.0)
    y = jnp.maximum(jnp.einsum("bsf,fh->bsh", h, w2) + b2, 0.0)
    return y


if __name__ == "__main__":
    # Small shapes consistent with the module's forward:
    #   Feedforward(filter_size=F, hidden_dim=H) applied to (batch, seq, H).
    B, S = 2, 8
    HIDDEN, FILTER = 32, 64

    key = jax.random.PRNGKey(0)
    kx, kw1, kb1, kw2, kb2 = jax.random.split(key, 5)

    x = jax.random.normal(kx, (B, S, HIDDEN), dtype=jnp.float32)

    # PyTorch Linear stores weight as (out, in); we use the transposed
    # (in, out) layout so the kernel can matmul directly.
    w1 = jax.random.normal(kw1, (HIDDEN, FILTER), dtype=jnp.float32) * 0.05
    b1 = jax.random.normal(kb1, (FILTER,), dtype=jnp.float32) * 0.05
    w2 = jax.random.normal(kw2, (FILTER, HIDDEN), dtype=jnp.float32) * 0.05
    b2 = jax.random.normal(kb2, (HIDDEN,), dtype=jnp.float32) * 0.05

    out = feedforward(x, w1, b1, w2, b2)
    out = jax.block_until_ready(out)

    ref = _reference(x, w1, b1, w2, b2)
    assert out.shape == (B, S, HIDDEN)
    assert jnp.allclose(out, ref, atol=1e-5, rtol=1e-5), "mismatch vs reference"

    print("KERNEL_OK")
</pallas_src>

<mosaic_0001>
module attributes {stable_mosaic.version = 11 : i64} {
  func.func @_ff_kernel(%arg0: i32, %arg1: i32, %arg2: memref<16x32xf32, #tpu.memory_space<vmem>>, %arg3: memref<32x64xf32, #tpu.memory_space<vmem>>, %arg4: memref<1x64xf32, #tpu.memory_space<vmem>>, %arg5: memref<64x32xf32, #tpu.memory_space<vmem>>, %arg6: memref<1x32xf32, #tpu.memory_space<vmem>>, %arg7: memref<16x32xf32, #tpu.memory_space<vmem>>, %arg8: memref<16x32xf32, #tpu.memory_space<vmem>>) attributes {dimension_semantics = [#tpu.dimension_semantics<parallel>, #tpu.dimension_semantics<arbitrary>], iteration_bounds = array<i64: 1, 1>, scalar_prefetch = 0 : i64, scratch_operands = 1 : i64, tpu.core_type = #tpu.core_type<tc>, window_params = [{transform_indices = @transform_0, window_bounds = array<i64: 16, 32>}, {transform_indices = @transform_1, window_bounds = array<i64: 32, 64>}, {transform_indices = @transform_2, window_bounds = array<i64: 1, 64>}, {transform_indices = @transform_3, window_bounds = array<i64: 64, 32>}, {pipeline_mode = #tpu.pipeline_mode<synchronous>, transform_indices = @transform_4, window_bounds = array<i64: 1, 32>}, {transform_indices = @transform_5, window_bounds = array<i64: 16, 32>}]} {
    %c0_i32 = arith.constant 0 : i32
    %0 = arith.cmpi eq, %arg1, %c0_i32 : i32
    %1 = arith.extui %0 : i1 to i32
    %c0_i32_0 = arith.constant 0 : i32
    %2 = arith.cmpi ne, %1, %c0_i32_0 : i32
    scf.if %2 {
      %cst_16 = arith.constant 0.000000e+00 : f32
      %19 = vector.broadcast %cst_16 : f32 to vector<16x32xf32>
      %c0_17 = arith.constant 0 : index
      %c0_18 = arith.constant 0 : index
      %20 = vector.load %arg8[%c0_17, %c0_18] : memref<16x32xf32, #tpu.memory_space<vmem>>, vector<16x32xf32>
      tpu.vector_store %arg8[%c0_17, %c0_18], %19 {strides = array<i32>} : memref<16x32xf32, #tpu.memory_space<vmem>>, vector<16x32xf32>,
    } else {
    }
    %c0 = arith.constant 0 : index
    %c0_1 = arith.constant 0 : index
    %3 = vector.load %arg2[%c0, %c0_1] : memref<16x32xf32, #tpu.memory_space<vmem>>, vector<16x32xf32>
    %c0_2 = arith.constant 0 : index
    %c0_3 = arith.constant 0 : index
    %4 = vector.load %arg3[%c0_2, %c0_3] : memref<32x64xf32, #tpu.memory_space<vmem>>, vector<32x64xf32>
    %cst = arith.constant dense<0.000000e+00> : vector<16x64xf32>
    %5 = tpu.matmul %3, %4, %cst {dimension_numbers = #tpu.dot_dimension_numbers<[1], [0], [0], [1], [0, 0, 1, 1], [], []>} : vector<16x32xf32>, vector<32x64xf32>, vector<16x64xf32> -> vector<16x64xf32>
    %c0_4 = arith.constant 0 : index
    %c0_5 = arith.constant 0 : index
    %6 = vector.load %arg4[%c0_4, %c0_5] : memref<1x64xf32, #tpu.memory_space<vmem>>, vector<1x64xf32>
    %7 = vector.broadcast %6 : vector<1x64xf32> to vector<16x64xf32>
    %8 = arith.addf %5, %7 : vector<16x64xf32>
    %cst_6 = arith.constant 0.000000e+00 : f32
    %9 = vector.broadcast %cst_6 : f32 to vector<16x64xf32>
    %10 = arith.maximumf %8, %9 : vector<16x64xf32>
    %c0_7 = arith.constant 0 : index
    %c0_8 = arith.constant 0 : index
    %11 = vector.load %arg8[%c0_7, %c0_8] : memref<16x32xf32, #tpu.memory_space<vmem>>, vector<16x32xf32>
    %c0_9 = arith.constant 0 : index
    %c0_10 = arith.constant 0 : index
    %12 = vector.load %arg5[%c0_9, %c0_10] : memref<64x32xf32, #tpu.memory_space<vmem>>, vector<64x32xf32>
    %cst_11 = arith.constant dense<0.000000e+00> : vector<16x32xf32>
    %13 = tpu.matmul %10, %12, %cst_11 {dimension_numbers = #tpu.dot_dimension_numbers<[1], [0], [0], [1], [0, 0, 1, 1], [], []>} : vector<16x64xf32>, vector<64x32xf32>, vector<16x32xf32> -> vector<16x32xf32>
    %14 = arith.addf %11, %13 : vector<16x32xf32>
    %c0_12 = arith.constant 0 : index
    %c0_13 = arith.constant 0 : index
    %15 = vector.load %arg8[%c0_12, %c0_13] : memref<16x32xf32, #tpu.memory_space<vmem>>, vector<16x32xf32>
    tpu.vector_store %arg8[%c0_12, %c0_13], %14 {strides = array<i32>} : memref<16x32xf32, #tpu.memory_space<vmem>>, vector<16x32xf32>,
    %c0_i32_14 = arith.constant 0 : i32
    %16 = arith.cmpi eq, %arg1, %c0_i32_14 : i32
    %17 = arith.extui %16 : i1 to i32
    %c0_i32_15 = arith.constant 0 : i32
    %18 = arith.cmpi ne, %17, %c0_i32_15 : i32
    scf.if %18 {
      %c0_16 = arith.constant 0 : index
      %c0_17 = arith.constant 0 : index
      %19 = vector.load %arg8[%c0_16, %c0_17] : memref<16x32xf32, #tpu.memory_space<vmem>>, vector<16x32xf32>
      %c0_18 = arith.constant 0 : index
      %c0_19 = arith.constant 0 : index
      %20 = vector.load %arg6[%c0_18, %c0_19] : memref<1x32xf32, #tpu.memory_space<vmem>>, vector<1x32xf32>
      %21 = vector.broadcast %20 : vector<1x32xf32> to vector<16x32xf32>
      %22 = arith.addf %19, %21 : vector<16x32xf32>
      %cst_20 = arith.constant 0.000000e+00 : f32
      %23 = vector.broadcast %cst_20 : f32 to vector<16x32xf32>
      %24 = arith.maximumf %22, %23 : vector<16x32xf32>
      %c0_21 = arith.constant 0 : index
      %c0_22 = arith.constant 0 : index
      %25 = vector.load %arg7[%c0_21, %c0_22] : memref<16x32xf32, #tpu.memory_space<vmem>>, vector<16x32xf32>
      tpu.vector_store %arg7[%c0_21, %c0_22], %24 {strides = array<i32>} : memref<16x32xf32, #tpu.memory_space<vmem>>, vector<16x32xf32>,
    } else {
    }
    return
  }
  func.func @transform_0(%arg0: i32, %arg1: i32) -> (i32, i32) {
    %c0_i32 = arith.constant 0 : i32
    %c0_i32_0 = arith.constant 0 : i32
    return %arg0, %c0_i32 : i32, i32
  }
  func.func @transform_1(%arg0: i32, %arg1: i32) -> (i32, i32) {
    %c0_i32 = arith.constant 0 : i32
    %c0_i32_0 = arith.constant 0 : i32
    return %c0_i32, %arg1 : i32, i32
  }
  func.func @transform_2(%arg0: i32, %arg1: i32) -> (i32, i32) {
    %c0_i32 = arith.constant 0 : i32
    %c0_i32_0 = arith.constant 0 : i32
    return %c0_i32, %arg1 : i32, i32
  }
  func.func @transform_3(%arg0: i32, %arg1: i32) -> (i32, i32) {
    %c0_i32 = arith.constant 0 : i32
    %c0_i32_0 = arith.constant 0 : i32
    return %arg1, %c0_i32 : i32, i32
  }
  func.func @transform_4(%arg0: i32, %arg1: i32) -> (i32, i32) {
    %c0_i32 = arith.constant 0 : i32
    %c0_i32_0 = arith.constant 0 : i32
    %c0_i32_1 = arith.constant 0 : i32
    return %c0_i32, %c0_i32_0 : i32, i32
  }
  func.func @transform_5(%arg0: i32, %arg1: i32) -> (i32, i32) {
    %c0_i32 = arith.constant 0 : i32
    %c0_i32_0 = arith.constant 0 : i32
    return %arg0, %c0_i32 : i32, i32
  }
}

</mosaic_0001>

<llo_original>
// kernel: feedforward.1
$region0: #{feedforward.1}
  #allocation0 [shape = 'u32[]', space=smem, size = 0x4, offset = 0x4, fixed_abs, tag = 'smem constant byte address 0x4 - core index']
  #allocation1 [shape = 'u32[72,128]{1,0:T(1,128)}', space=vmem, size = 0x9000, scoped, tag = 'internal scratch']
  #allocation2 [shape = 'f32[16,32]{1,0:T(8,128)}', space=vmem, size = 0x2000, scoped, tag = 'scratch operand']
  %s0 = inlined_call_operand.vmem [shape: f32[16,32], index: 0, kind: input, shape index: {}]
  %s1 = inlined_call_operand.vmem [shape: f32[32,64], index: 1, kind: input, shape index: {}]
  %s2 = inlined_call_operand.vmem [shape: f32[1,64], index: 2, kind: input, shape index: {}]
  %s3 = inlined_call_operand.vmem [shape: f32[64,32], index: 3, kind: input, shape index: {}]
  %s4 = inlined_call_operand.vmem [shape: f32[1,32], index: 4, kind: input, shape index: {}]
  %s5 = inlined_call_operand.hbm [shape: f32[16,32], index: 5, kind: output, shape index: {}]
  %s6 = sld [smem:[#allocation0]]
  $region38: #{feedforward.1} parent=0
    _
  %s8 = ssub.s32 1, %s6
  %s9 = scalar_select 0, %s8, %s6
  $region1: #{feedforward.1} parent=0
    #allocation3 [shape = 'u8[8192]{0}', space=vmem, size = 0x2000, scoped, tag = 'output window, operand 0, single buffered']
    #allocation4 [shape = 's32[1]{0}', space=sflag, size = 0x4, scoped, tag = 'scoped memory for feedforward.1']
    %10 = vsyncpa [#allocation4], 0
    // Predicated region
    $region2: #{feedforward.1} parent=1 // pred_check
      _
    $region3: #{feedforward.1} parent=1 // pred_check_branch
      %12 = sbr.rel (0) target = $region5
    $region4: #{feedforward.1} parent=1 // pred_region
      _
    $region5: #{feedforward.1} parent=1 // pred_fallthru
      _
    // Predicated region
    $region6: #{feedforward.1} parent=1 // pred_check
      _
    $region7: #{feedforward.1} parent=1 // pred_check_branch
      %14 = sbr.rel (0) target = $region9
    $region8: #{feedforward.1} parent=1 // pred_region
      _
    $region9: #{feedforward.1} parent=1 // pred_fallthru
      _
    // Predicated region
    $region10: #{feedforward.1} parent=1 // pred_check
      _
    $region11: #{feedforward.1} parent=1 // pred_check_branch
      %16 = sbr.rel (0) target = $region13
    $region12: #{feedforward.1} parent=1 // pred_region
      _
    $region13: #{feedforward.1} parent=1 // pred_fallthru
      _
    // Predicated region
    $region14: #{feedforward.1} parent=1 // pred_check
      _
    $region15: #{feedforward.1} parent=1 // pred_check_branch
      %18 = sbr.rel (0) target = $region17
    $region16: #{feedforward.1} parent=1 // pred_region
      _
    $region17: #{feedforward.1} parent=1 // pred_fallthru
      _
    // Predicated region
    $region18: #{feedforward.1} parent=1 // pred_check
      _
    $region19: #{feedforward.1} parent=1 // pred_check_branch
      %20 = sbr.rel (0) target = $region21
    $region20: #{feedforward.1} parent=1 // pred_region
      _
    $region21: #{feedforward.1} parent=1 // pred_fallthru
      _
    %p21 = scmp.eq.s32.totalorder 0, 0
    // Predicated region
    $region22: #{feedforward.1} parent=1 // pred_check
      %p22 = pneg %p21
    $region23: #{feedforward.1} parent=1 // pred_check_branch
      %24 = sbr.rel (%p22) target = $region25
    $region24: #{feedforward.1} parent=1 // pred_region
      %vm25 = vcmask 261120
      %26 = vst.msk [vmem:[#allocation2] sm:$0xff] %vm25, 0.0
      %27 = vst.msk [vmem:[#allocation2 + $0x8] sm:$0xff] %vm25, 0.0
    $region25: #{feedforward.1} parent=1 // pred_fallthru
      _
    %v28 = vld [vmem:[%s0] sm:$0xff]
    %v29 = vld [vmem:[%s0 + $0x8] sm:$0xff]
    %v30 = vld [vmem:[%s1] sm:$0xff]
    %v31 = vld [vmem:[%s1 + $0x8] sm:$0xff]
    %v32 = vld [vmem:[%s1 + $0x10] sm:$0xff]
    %v33 = vld [vmem:[%s1 + $0x18] sm:$0xff]
    %v34 = vld [vmem:[%s2] sm:$0x1]
    %v36 = vperm.slane %v34, 0
    %vm38 = vcmask 261120
    %v40 = vsel %vm38, %v28, 0
    %v43 = vsel %vm38, %v29, 0
    %45 = vmatpush.msra.mxu0 0.0
    %46 = vmatpush.msra.mxu0 0.0
    %47 = vmatpush.msra.mxu0 0.0
    %48 = vmatpush.msra.mxu0 0.0
    %49 = vmatpush.msra.mxu0 0.0
    %50 = vmatpush.msra.mxu0 0.0
    %51 = vmatpush.msra.mxu0 0.0
    %52 = vmatpush.msra.mxu0 0.0
    %53 = vmatpush.msra.mxu0 0.0
    %54 = vmatpush.msra.mxu0 0.0
    %55 = vmatpush.msra.mxu0 0.0
    %56 = vmatpush.msra.mxu0 0.0
    %57 = vmatpush.msra.mxu0 %v33
    %58 = vmatpush.msra.mxu0 %v32
    %59 = vmatpush.msra.mxu0 %v31
    %60 = vmatpush.msra.mxu0 %v30
    %61 = vmatmul.f32.gmra.mxu0 %v40
    %v62 = vpop.f32.mrf.mxu0
    %v63 = vadd.f32 %v36, %v62
    %64 = vmatmul.f32.gmra.mxu0 %v43
    %v65 = vpop.f32.mrf.mxu0
    %v66 = vadd.f32 %v36, %v65
    %67 = vdwg.mxu0
    %v68 = vmax.f32 %v63, 0.0
    %v69 = vmax.f32 %v66, 0.0
    %v70 = vld [vmem:[#allocation2] sm:$0xff]
    %v71 = vld [vmem:[#allocation2 + $0x8] sm:$0xff]
    %v72 = vld [vmem:[%s3] sm:$0xff]
    %v73 = vld [vmem:[%s3 + $0x8] sm:$0xff]
    %v74 = vld [vmem:[%s3 + $0x10] sm:$0xff]
    %v75 = vld [vmem:[%s3 + $0x18] sm:$0xff]
    %v76 = vld [vmem:[%s3 + $0x20] sm:$0xff]
    %v77 = vld [vmem:[%s3 + $0x28] sm:$0xff]
    %v78 = vld [vmem:[%s3 + $0x30] sm:$0xff]
    %v79 = vld [vmem:[%s3 + $0x38] sm:$0xff]
    %vm80 = vcmask 523264
    %v82 = vsel %vm80, %v68, 0
    %v85 = vsel %vm80, %v69, 0
    %87 = vmatpush.msra.mxu0 0.0
    %88 = vmatpush.msra.mxu0 0.0
    %89 = vmatpush.msra.mxu0 0.0
    %90 = vmatpush.msra.mxu0 0.0
    %91 = vmatpush.msra.mxu0 0.0
    %92 = vmatpush.msra.mxu0 0.0
    %93 = vmatpush.msra.mxu0 0.0
    %94 = vmatpush.msra.mxu0 0.0
    %95 = vmatpush.msra.mxu0 %v79
    %96 = vmatpush.msra.mxu0 %v78
    %97 = vmatpush.msra.mxu0 %v77
    %98 = vmatpush.msra.mxu0 %v76
    %99 = vmatpush.msra.mxu0 %v75
    %100 = vmatpush.msra.mxu0 %v74
    %101 = vmatpush.msra.mxu0 %v73
    %102 = vmatpush.msra.mxu0 %v72
    %103 = vmatmul.f32.gmra.mxu0 %v82
    %v104 = vpop.f32.mrf.mxu0
    %v105 = vadd.f32 0.0, %v104
    %106 = vmatmul.f32.gmra.mxu0 %v85
    %v107 = vpop.f32.mrf.mxu0
    %v108 = vadd.f32 0.0, %v107
    %109 = vdwg.mxu0
    %v110 = vadd.f32 %v70, %v105
    %v111 = vadd.f32 %v71, %v108
    %112 = vst.msk [vmem:[#allocation2] sm:$0xff] %vm38, %v110
    %113 = vst.msk [vmem:[#allocation2 + $0x8] sm:$0xff] %vm38, %v111
    // Predicated region
    $region26: #{feedforward.1} parent=1 // pred_check
      %p114 = pneg %p21
    $region27: #{feedforward.1} parent=1 // pred_check_branch
      %116 = sbr.rel (%p114) target = $region29
    $region28: #{feedforward.1} parent=1 // pred_region
      %v117 = vld [vmem:[#allocation2] sm:$0xff]
      %v118 = vld [vmem:[#allocation2 + $0x8] sm:$0xff]
      %v119 = vld [vmem:[%s4] sm:$0x1]
      %v121 = vperm.slane %v119, 0
      %v123 = vadd.f32 %v117, %v121
      %v124 = vadd.f32 %v118, %v121
      %v125 = vmax.f32 %v123, 0.0
      %v126 = vmax.f32 %v124, 0.0
      %127 = vst.msk [vmem:[#allocation3] sm:$0xff] %vm38, %v125
      %128 = vst.msk [vmem:[#allocation3 + $0x8] sm:$0xff] %vm38, %v126
    $region29: #{feedforward.1} parent=1 // pred_fallthru
      _
    // Predicated region
    $region30: #{feedforward.1} parent=1 // pred_check
      _
    $region31: #{feedforward.1} parent=1 // pred_check_branch
      %130 = sbr.rel (0) target = $region33
    $region32: #{feedforward.1} parent=1 // pred_region
      %132 = vsyncadd [#allocation4], 0
      %s133 = sshll.u32 [#allocation3], 4
      %s134 = int_to_ptr.vmem [resolvable:$true] %s133
      %s135 = sshll.u32 %s5, 4
      %s136 = int_to_ptr.hbm [resolvable:$true] %s135
      %141 = dma.vmem_to_hbm [thread:$0]  %s134, 256, %s136, [#allocation4], 128, 128, 8
    $region33: #{feedforward.1} parent=1 // pred_fallthru
      _
    // Predicated region
    $region34: #{feedforward.1} parent=1 // pred_check
      _
    $region35: #{feedforward.1} parent=1 // pred_check_branch
      %143 = sbr.rel (0) target = $region37
    $region36: #{feedforward.1} parent=1 // pred_region
      %145 = dma.done [#allocation4], 256
    $region37: #{feedforward.1} parent=1 // pred_fallthru
      _
    %146 = vsyncpa [#allocation4], 1

</llo_original>
